<compile_context>
chip_gen: v7x
topology: tpu7x:2x2x1
jax: 0.10.0
libtpu: 0.0.40
codegen_flags: <defaults>
</compile_context>

<pallas_src>
import math
import jax
import jax.numpy as jnp
from jax.experimental import pallas as pl
from jax.experimental.pallas import tpu as pltpu


def _round_up(x, m):
    return ((x + m - 1) // m) * m


def _complex_linear_kernel(xr_ref, xi_ref, wr_ref, wi_ref, br_ref, bi_ref,
                           yr_ref, yi_ref, accr_ref, acci_ref):
    k = pl.program_id(2)

    @pl.when(k == 0)
    def _():
        accr_ref[...] = jnp.zeros_like(accr_ref)
        acci_ref[...] = jnp.zeros_like(acci_ref)

    xr = xr_ref[...]
    xi = xi_ref[...]
    wr = wr_ref[...]
    wi = wi_ref[...]

    # 4 real MXU matmuls; the add/sub combine is cheap VPU filler that
    # overlaps with the MXU (separate VLIW slots).
    accr_ref[...] += (
        jnp.dot(xr, wr, preferred_element_type=jnp.float32)
        - jnp.dot(xi, wi, preferred_element_type=jnp.float32))
    acci_ref[...] += (
        jnp.dot(xr, wi, preferred_element_type=jnp.float32)
        + jnp.dot(xi, wr, preferred_element_type=jnp.float32))

    @pl.when(k == pl.num_programs(2) - 1)
    def _():
        # Bias added once, in the finalize step.
        yr_ref[...] = (accr_ref[...] + br_ref[...]).astype(yr_ref.dtype)
        yi_ref[...] = (acci_ref[...] + bi_ref[...]).astype(yi_ref.dtype)


def _complex_matmul(xr, xi, wr, wi, br, bi, *, tm, tn, tk):
    M, K = xr.shape
    _, N = wr.shape
    grid = (M // tm, N // tn, K // tk)

    cost = pl.CostEstimate(
        flops=8 * M * N * K,
        transcendentals=0,
        bytes_accessed=4 * (2 * M * K + 2 * K * N + 2 * N + 2 * M * N),
    )

    x_spec = pl.BlockSpec((tm, tk), lambda i, j, k: (i, k))
    w_spec = pl.BlockSpec((tk, tn), lambda i, j, k: (k, j))
    b_spec = pl.BlockSpec((1, tn), lambda i, j, k: (0, j))
    y_spec = pl.BlockSpec((tm, tn), lambda i, j, k: (i, j))

    return pl.pallas_call(
        _complex_linear_kernel,
        out_shape=(jax.ShapeDtypeStruct((M, N), jnp.float32),
                   jax.ShapeDtypeStruct((M, N), jnp.float32)),
        grid_spec=pltpu.PrefetchScalarGridSpec(
            num_scalar_prefetch=0,
            grid=grid,
            in_specs=[x_spec, x_spec, w_spec, w_spec, b_spec, b_spec],
            out_specs=[y_spec, y_spec],
            scratch_shapes=[pltpu.VMEM((tm, tn), jnp.float32),
                            pltpu.VMEM((tm, tn), jnp.float32)],
        ),
        compiler_params=pltpu.CompilerParams(
            dimension_semantics=("parallel", "parallel", "arbitrary")),
        cost_estimate=cost,
    )(xr, xi, wr, wi, br, bi)


def complex_linear(x, weight_real, weight_imag, bias_real=None, bias_imag=None,
                   *, tm_max=256, tn_max=256, tk_max=512):
    """x: complex64 (..., in_features) -> complex64 (..., out_features)."""
    in_features = x.shape[-1]
    out_features = weight_real.shape[0]
    lead = x.shape[:-1]
    M = int(math.prod(lead)) if lead else 1

    xr = jnp.real(x).reshape(M, in_features).astype(jnp.float32)
    xi = jnp.imag(x).reshape(M, in_features).astype(jnp.float32)
    wr = weight_real.astype(jnp.float32).T          # (K, N)
    wi = weight_imag.astype(jnp.float32).T          # (K, N)
    # TODO(synk): for repeated calls with static weights, pre-transpose/pad
    # wr/wi once outside the hot path instead of every call.

    if bias_real is None:
        br = jnp.zeros((out_features,), jnp.float32)
        bi = jnp.zeros((out_features,), jnp.float32)
    else:
        br = bias_real.astype(jnp.float32)
        bi = bias_imag.astype(jnp.float32)
    br = br[None, :]
    bi = bi[None, :]

    K, N = in_features, out_features

    # Tile sizes: multiples of (8, 128), capped for VMEM.
    tm = min(tm_max, _round_up(M, 8))
    tk = min(tk_max, _round_up(K, 128))
    tn = min(tn_max, _round_up(N, 128))
    M_pad = _round_up(M, tm)
    K_pad = _round_up(K, tk)
    N_pad = _round_up(N, tn)

    xr = jnp.pad(xr, ((0, M_pad - M), (0, K_pad - K)))
    xi = jnp.pad(xi, ((0, M_pad - M), (0, K_pad - K)))
    wr = jnp.pad(wr, ((0, K_pad - K), (0, N_pad - N)))
    wi = jnp.pad(wi, ((0, K_pad - K), (0, N_pad - N)))
    br = jnp.pad(br, ((0, 0), (0, N_pad - N)))
    bi = jnp.pad(bi, ((0, 0), (0, N_pad - N)))

    yr_pad, yi_pad = _complex_matmul(xr, xi, wr, wi, br, bi, tm=tm, tn=tn, tk=tk)

    yr = yr_pad[:M, :N]
    yi = yi_pad[:M, :N]
    y = jax.lax.complex(yr, yi).astype(jnp.complex64)
    return y.reshape(*lead, out_features)


def init_params(key, in_features, out_features):
    """Deterministic init mirroring the PyTorch module's __init__ shapes."""
    k1, k2, k3, k4 = jax.random.split(key, 4)
    bound = 1.0 / math.sqrt(in_features)
    weight_real = jax.random.uniform(k1, (out_features, in_features),
                                     jnp.float32, -bound, bound)
    weight_imag = jax.random.uniform(k2, (out_features, in_features),
                                     jnp.float32, -bound, bound)
    bias_real = jax.random.uniform(k3, (out_features,), jnp.float32, -bound, bound)
    bias_imag = jax.random.uniform(k4, (out_features,), jnp.float32, -bound, bound)
    return weight_real, weight_imag, bias_real, bias_imag


if __name__ == "__main__":
    key = jax.random.PRNGKey(0)
    kx_r, kx_i, kp = jax.random.split(key, 3)

    batch, seq, in_features, out_features = 2, 8, 32, 16

    x_real = jax.random.normal(kx_r, (batch, seq, in_features), jnp.float32)
    x_imag = jax.random.normal(kx_i, (batch, seq, in_features), jnp.float32)
    x = (x_real + 1j * x_imag).astype(jnp.complex64)

    weight_real, weight_imag, bias_real, bias_imag = init_params(
        kp, in_features, out_features)

    y = complex_linear(x, weight_real, weight_imag, bias_real, bias_imag)
    y = jax.block_until_ready(y)

    # Pure-JAX reference check (complex linear).
    W = (weight_real + 1j * weight_imag).astype(jnp.complex64)
    b = (bias_real + 1j * bias_imag).astype(jnp.complex64)
    y_ref = jnp.einsum("bsk,nk->bsn", x, W) + b
    assert y.shape == (batch, seq, out_features)
    assert y.dtype == jnp.complex64
    assert jnp.max(jnp.abs(y - y_ref)) < 1e-4

    print("KERNEL_OK")
</pallas_src>

<mosaic_0001>
module attributes {stable_mosaic.version = 11 : i64} {
  func.func @_complex_linear_kernel(%arg0: i32, %arg1: i32, %arg2: i32, %arg3: memref<16x128xf32, #tpu.memory_space<vmem>>, %arg4: memref<16x128xf32, #tpu.memory_space<vmem>>, %arg5: memref<128x128xf32, #tpu.memory_space<vmem>>, %arg6: memref<128x128xf32, #tpu.memory_space<vmem>>, %arg7: memref<1x128xf32, #tpu.memory_space<vmem>>, %arg8: memref<1x128xf32, #tpu.memory_space<vmem>>, %arg9: memref<16x128xf32, #tpu.memory_space<vmem>>, %arg10: memref<16x128xf32, #tpu.memory_space<vmem>>, %arg11: memref<16x128xf32, #tpu.memory_space<vmem>>, %arg12: memref<16x128xf32, #tpu.memory_space<vmem>>) attributes {dimension_semantics = [#tpu.dimension_semantics<parallel>, #tpu.dimension_semantics<parallel>, #tpu.dimension_semantics<arbitrary>], iteration_bounds = array<i64: 1, 1, 1>, scalar_prefetch = 0 : i64, scratch_operands = 2 : i64, tpu.core_type = #tpu.core_type<tc>, window_params = [{transform_indices = @transform_0, window_bounds = array<i64: 16, 128>}, {transform_indices = @transform_1, window_bounds = array<i64: 16, 128>}, {transform_indices = @transform_2, window_bounds = array<i64: 128, 128>}, {transform_indices = @transform_3, window_bounds = array<i64: 128, 128>}, {transform_indices = @transform_4, window_bounds = array<i64: 1, 128>}, {transform_indices = @transform_5, window_bounds = array<i64: 1, 128>}, {transform_indices = @transform_6, window_bounds = array<i64: 16, 128>}, {transform_indices = @transform_7, window_bounds = array<i64: 16, 128>}]} {
    %c0_i32 = arith.constant 0 : i32
    %0 = arith.cmpi eq, %arg2, %c0_i32 : i32
    %1 = arith.extui %0 : i1 to i32
    %c0_i32_0 = arith.constant 0 : i32
    %2 = arith.cmpi ne, %1, %c0_i32_0 : i32
    scf.if %2 {
      %cst_21 = arith.constant 0.000000e+00 : f32
      %22 = vector.broadcast %cst_21 : f32 to vector<16x128xf32>
      %c0_22 = arith.constant 0 : index
      %c0_23 = arith.constant 0 : index
      %23 = vector.load %arg11[%c0_22, %c0_23] : memref<16x128xf32, #tpu.memory_space<vmem>>, vector<16x128xf32>
      tpu.vector_store %arg11[%c0_22, %c0_23], %22 {strides = array<i32>} : memref<16x128xf32, #tpu.memory_space<vmem>>, vector<16x128xf32>,
      %cst_24 = arith.constant 0.000000e+00 : f32
      %24 = vector.broadcast %cst_24 : f32 to vector<16x128xf32>
      %c0_25 = arith.constant 0 : index
      %c0_26 = arith.constant 0 : index
      %25 = vector.load %arg12[%c0_25, %c0_26] : memref<16x128xf32, #tpu.memory_space<vmem>>, vector<16x128xf32>
      tpu.vector_store %arg12[%c0_25, %c0_26], %24 {strides = array<i32>} : memref<16x128xf32, #tpu.memory_space<vmem>>, vector<16x128xf32>,
    } else {
    }
    %c0 = arith.constant 0 : index
    %c0_1 = arith.constant 0 : index
    %3 = vector.load %arg3[%c0, %c0_1] : memref<16x128xf32, #tpu.memory_space<vmem>>, vector<16x128xf32>
    %c0_2 = arith.constant 0 : index
    %c0_3 = arith.constant 0 : index
    %4 = vector.load %arg4[%c0_2, %c0_3] : memref<16x128xf32, #tpu.memory_space<vmem>>, vector<16x128xf32>
    %c0_4 = arith.constant 0 : index
    %c0_5 = arith.constant 0 : index
    %5 = vector.load %arg5[%c0_4, %c0_5] : memref<128x128xf32, #tpu.memory_space<vmem>>, vector<128x128xf32>
    %c0_6 = arith.constant 0 : index
    %c0_7 = arith.constant 0 : index
    %6 = vector.load %arg6[%c0_6, %c0_7] : memref<128x128xf32, #tpu.memory_space<vmem>>, vector<128x128xf32>
    %c0_8 = arith.constant 0 : index
    %c0_9 = arith.constant 0 : index
    %7 = vector.load %arg11[%c0_8, %c0_9] : memref<16x128xf32, #tpu.memory_space<vmem>>, vector<16x128xf32>
    %cst = arith.constant dense<0.000000e+00> : vector<16x128xf32>
    %8 = tpu.matmul %3, %5, %cst {dimension_numbers = #tpu.dot_dimension_numbers<[1], [0], [0], [1], [0, 0, 1, 1], [], []>} : vector<16x128xf32>, vector<128x128xf32>, vector<16x128xf32> -> vector<16x128xf32>
    %cst_10 = arith.constant dense<0.000000e+00> : vector<16x128xf32>
    %9 = tpu.matmul %4, %6, %cst_10 {dimension_numbers = #tpu.dot_dimension_numbers<[1], [0], [0], [1], [0, 0, 1, 1], [], []>} : vector<16x128xf32>, vector<128x128xf32>, vector<16x128xf32> -> vector<16x128xf32>
    %10 = arith.subf %8, %9 : vector<16x128xf32>
    %11 = arith.addf %7, %10 : vector<16x128xf32>
    %c0_11 = arith.constant 0 : index
    %c0_12 = arith.constant 0 : index
    %12 = vector.load %arg11[%c0_11, %c0_12] : memref<16x128xf32, #tpu.memory_space<vmem>>, vector<16x128xf32>
    tpu.vector_store %arg11[%c0_11, %c0_12], %11 {strides = array<i32>} : memref<16x128xf32, #tpu.memory_space<vmem>>, vector<16x128xf32>,
    %c0_13 = arith.constant 0 : index
    %c0_14 = arith.constant 0 : index
    %13 = vector.load %arg12[%c0_13, %c0_14] : memref<16x128xf32, #tpu.memory_space<vmem>>, vector<16x128xf32>
    %cst_15 = arith.constant dense<0.000000e+00> : vector<16x128xf32>
    %14 = tpu.matmul %3, %6, %cst_15 {dimension_numbers = #tpu.dot_dimension_numbers<[1], [0], [0], [1], [0, 0, 1, 1], [], []>} : vector<16x128xf32>, vector<128x128xf32>, vector<16x128xf32> -> vector<16x128xf32>
    %cst_16 = arith.constant dense<0.000000e+00> : vector<16x128xf32>
    %15 = tpu.matmul %4, %5, %cst_16 {dimension_numbers = #tpu.dot_dimension_numbers<[1], [0], [0], [1], [0, 0, 1, 1], [], []>} : vector<16x128xf32>, vector<128x128xf32>, vector<16x128xf32> -> vector<16x128xf32>
    %16 = arith.addf %14, %15 : vector<16x128xf32>
    %17 = arith.addf %13, %16 : vector<16x128xf32>
    %c0_17 = arith.constant 0 : index
    %c0_18 = arith.constant 0 : index
    %18 = vector.load %arg12[%c0_17, %c0_18] : memref<16x128xf32, #tpu.memory_space<vmem>>, vector<16x128xf32>
    tpu.vector_store %arg12[%c0_17, %c0_18], %17 {strides = array<i32>} : memref<16x128xf32, #tpu.memory_space<vmem>>, vector<16x128xf32>,
    %c0_i32_19 = arith.constant 0 : i32
    %19 = arith.cmpi eq, %arg2, %c0_i32_19 : i32
    %20 = arith.extui %19 : i1 to i32
    %c0_i32_20 = arith.constant 0 : i32
    %21 = arith.cmpi ne, %20, %c0_i32_20 : i32
    scf.if %21 {
      %c0_21 = arith.constant 0 : index
      %c0_22 = arith.constant 0 : index
      %22 = vector.load %arg11[%c0_21, %c0_22] : memref<16x128xf32, #tpu.memory_space<vmem>>, vector<16x128xf32>
      %c0_23 = arith.constant 0 : index
      %c0_24 = arith.constant 0 : index
      %23 = vector.load %arg7[%c0_23, %c0_24] : memref<1x128xf32, #tpu.memory_space<vmem>>, vector<1x128xf32>
      %24 = vector.broadcast %23 : vector<1x128xf32> to vector<16x128xf32>
      %25 = arith.addf %22, %24 : vector<16x128xf32>
      %c0_25 = arith.constant 0 : index
      %c0_26 = arith.constant 0 : index
      %26 = vector.load %arg9[%c0_25, %c0_26] : memref<16x128xf32, #tpu.memory_space<vmem>>, vector<16x128xf32>
      tpu.vector_store %arg9[%c0_25, %c0_26], %25 {strides = array<i32>} : memref<16x128xf32, #tpu.memory_space<vmem>>, vector<16x128xf32>,
      %c0_27 = arith.constant 0 : index
      %c0_28 = arith.constant 0 : index
      %27 = vector.load %arg12[%c0_27, %c0_28] : memref<16x128xf32, #tpu.memory_space<vmem>>, vector<16x128xf32>
      %c0_29 = arith.constant 0 : index
      %c0_30 = arith.constant 0 : index
      %28 = vector.load %arg8[%c0_29, %c0_30] : memref<1x128xf32, #tpu.memory_space<vmem>>, vector<1x128xf32>
      %29 = vector.broadcast %28 : vector<1x128xf32> to vector<16x128xf32>
      %30 = arith.addf %27, %29 : vector<16x128xf32>
      %c0_31 = arith.constant 0 : index
      %c0_32 = arith.constant 0 : index
      %31 = vector.load %arg10[%c0_31, %c0_32] : memref<16x128xf32, #tpu.memory_space<vmem>>, vector<16x128xf32>
      tpu.vector_store %arg10[%c0_31, %c0_32], %30 {strides = array<i32>} : memref<16x128xf32, #tpu.memory_space<vmem>>, vector<16x128xf32>,
    } else {
    }
    return
  }
  func.func @transform_0(%arg0: i32, %arg1: i32, %arg2: i32) -> (i32, i32) {
    %c0_i32 = arith.constant 0 : i32
    return %arg0, %arg2 : i32, i32
  }
  func.func @transform_1(%arg0: i32, %arg1: i32, %arg2: i32) -> (i32, i32) {
    %c0_i32 = arith.constant 0 : i32
    return %arg0, %arg2 : i32, i32
  }
  func.func @transform_2(%arg0: i32, %arg1: i32, %arg2: i32) -> (i32, i32) {
    %c0_i32 = arith.constant 0 : i32
    return %arg2, %arg1 : i32, i32
  }
  func.func @transform_3(%arg0: i32, %arg1: i32, %arg2: i32) -> (i32, i32) {
    %c0_i32 = arith.constant 0 : i32
    return %arg2, %arg1 : i32, i32
  }
  func.func @transform_4(%arg0: i32, %arg1: i32, %arg2: i32) -> (i32, i32) {
    %c0_i32 = arith.constant 0 : i32
    %c0_i32_0 = arith.constant 0 : i32
    return %c0_i32, %arg1 : i32, i32
  }
  func.func @transform_5(%arg0: i32, %arg1: i32, %arg2: i32) -> (i32, i32) {
    %c0_i32 = arith.constant 0 : i32
    %c0_i32_0 = arith.constant 0 : i32
    return %c0_i32, %arg1 : i32, i32
  }
  func.func @transform_6(%arg0: i32, %arg1: i32, %arg2: i32) -> (i32, i32) {
    %c0_i32 = arith.constant 0 : i32
    return %arg0, %arg1 : i32, i32
  }
  func.func @transform_7(%arg0: i32, %arg1: i32, %arg2: i32) -> (i32, i32) {
    %c0_i32 = arith.constant 0 : i32
    return %arg0, %arg1 : i32, i32
  }
}

</mosaic_0001>

<llo_original>
// kernel: tpu_custom_call.1
$region0: #{tpu_custom_call.1}
  #allocation0 [shape = 'u32[]', space=smem, size = 0x4, offset = 0x4, fixed_abs, tag = 'smem constant byte address 0x4 - core index']
  #allocation1 [shape = 'u32[144,128]{1,0:T(1,128)}', space=vmem, size = 0x12000, scoped, tag = 'internal scratch']
  #allocation2 [shape = 'f32[16,128]{1,0:T(8,128)}', space=vmem, size = 0x2000, scoped, tag = 'scratch operand']
  #allocation3 [shape = 'f32[16,128]{1,0:T(8,128)}', space=vmem, size = 0x2000, scoped, tag = 'scratch operand']
  %s0 = inlined_call_operand.hbm [shape: f32[16,128], index: 0, kind: input, shape index: {}]
  %s1 = inlined_call_operand.hbm [shape: f32[16,128], index: 1, kind: input, shape index: {}]
  %s2 = inlined_call_operand.hbm [shape: f32[128,128], index: 2, kind: input, shape index: {}]
  %s3 = inlined_call_operand.hbm [shape: f32[128,128], index: 3, kind: input, shape index: {}]
  %s4 = inlined_call_operand.vmem [shape: f32[1,128], index: 4, kind: input, shape index: {}]
  %s5 = inlined_call_operand.vmem [shape: f32[1,128], index: 5, kind: input, shape index: {}]
  %s6 = inlined_call_operand.hbm [shape: f32[16,128], index: 6, kind: output, shape index: {0}]
  %s7 = inlined_call_operand.hbm [shape: f32[16,128], index: 7, kind: output, shape index: {1}]
  %8 = xla_tuple %s6, %s7
  %s9 = sld [smem:[#allocation0]]
  $region66: #{tpu_custom_call.1} parent=0
    _
  %s11 = ssub.s32 1, %s9
  %s12 = scalar_select 0, %s11, %s9
  $region1: #{tpu_custom_call.1} parent=0
    #allocation4 [shape = 'u8[8192]{0}', space=vmem, size = 0x2000, scoped, tag = 'input window, operand 0, single buffered']
    #allocation5 [shape = 's32[1]{0}', space=sflag, size = 0x4, scoped, tag = 'scoped memory for tpu_custom_call.1']
    #allocation6 [shape = 's32[1]{0}', space=sflag, size = 0x4, scoped, tag = 'scoped memory for tpu_custom_call.1']
    #allocation7 [shape = 'u8[8192]{0}', space=vmem, size = 0x2000, scoped, tag = 'input window, operand 1, single buffered']
    #allocation8 [shape = 's32[1]{0}', space=sflag, size = 0x4, scoped, tag = 'scoped memory for tpu_custom_call.1']
    #allocation9 [shape = 'u8[65536]{0}', space=vmem, size = 0x10000, scoped, tag = 'input window, operand 2, single buffered']
    #allocation10 [shape = 'u8[65536]{0}', space=vmem, size = 0x10000, scoped, tag = 'input window, operand 3, single buffered']
    #allocation11 [shape = 's32[1]{0}', space=sflag, size = 0x4, scoped, tag = 'scoped memory for tpu_custom_call.1']
    #allocation12 [shape = 'u8[8192]{0}', space=vmem, size = 0x2000, scoped, tag = 'output window, operand 0, single buffered']
    #allocation13 [shape = 'u8[8192]{0}', space=vmem, size = 0x2000, scoped, tag = 'output window, operand 1, single buffered']
    #allocation14 [shape = 's32[1]{0}', space=sflag, size = 0x4, scoped, tag = 'scoped memory for tpu_custom_call.1']
    %13 = vsyncpa [#allocation5], 0
    %14 = vsyncpa [#allocation8], 0
    %15 = vsyncpa [#allocation11], 0
    %16 = vsyncpa [#allocation6], 0
    %17 = vsyncpa [#allocation14], 0
    // Predicated region
    $region2: #{tpu_custom_call.1} parent=1 // pred_check
      _
    $region3: #{tpu_custom_call.1} parent=1 // pred_check_branch
      %19 = sbr.rel (0) target = $region5
    $region4: #{tpu_custom_call.1} parent=1 // pred_region
      %s21 = ssub.s32 256, 256
      %22 = vsyncadd [#allocation5], %s21
      %s23 = sshll.u32 [#allocation4], 4
      %s24 = int_to_ptr.vmem [resolvable:$true] %s23
      %29 = dma.hbm_to_vmem [thread:$0]  %s0, 256, %s24, [#allocation5], 128, 128, 8
    $region5: #{tpu_custom_call.1} parent=1 // pred_fallthru
      _
    // Predicated region
    $region6: #{tpu_custom_call.1} parent=1 // pred_check
      _
    $region7: #{tpu_custom_call.1} parent=1 // pred_check_branch
      %31 = sbr.rel (0) target = $region9
    $region8: #{tpu_custom_call.1} parent=1 // pred_region
      %s33 = ssub.s32 256, 256
      %34 = vsyncadd [#allocation8], %s33
      %s35 = sshll.u32 [#allocation7], 4
      %s36 = int_to_ptr.vmem [resolvable:$true] %s35
      %41 = dma.hbm_to_vmem [thread:$0]  %s1, 256, %s36, [#allocation8], 128, 128, 8
    $region9: #{tpu_custom_call.1} parent=1 // pred_fallthru
      _
    // Predicated region
    $region10: #{tpu_custom_call.1} parent=1 // pred_check
      _
    $region11: #{tpu_custom_call.1} parent=1 // pred_check_branch
      %43 = sbr.rel (0) target = $region13
    $region12: #{tpu_custom_call.1} parent=1 // pred_region
      %s45 = ssub.s32 2048, 2048
      %46 = vsyncadd [#allocation8], %s45
      %s47 = sshll.u32 [#allocation9], 4
      %s48 = int_to_ptr.vmem [resolvable:$true] %s47
      %53 = dma.hbm_to_vmem [thread:$0]  %s2, 2048, %s48, [#allocation8], 128, 128, 8
    $region13: #{tpu_custom_call.1} parent=1 // pred_fallthru
      _
    // Predicated region
    $region14: #{tpu_custom_call.1} parent=1 // pred_check
      _
    $region15: #{tpu_custom_call.1} parent=1 // pred_check_branch
      %55 = sbr.rel (0) target = $region17
    $region16: #{tpu_custom_call.1} parent=1 // pred_region
      %s57 = ssub.s32 2048, 2048
      %58 = vsyncadd [#allocation11], %s57
      %s59 = sshll.u32 [#allocation10], 4
      %s60 = int_to_ptr.vmem [resolvable:$true] %s59
      %65 = dma.hbm_to_vmem [thread:$0]  %s3, 2048, %s60, [#allocation11], 128, 128, 8
    $region17: #{tpu_custom_call.1} parent=1 // pred_fallthru
      _
    // Predicated region
    $region18: #{tpu_custom_call.1} parent=1 // pred_check
      _
    $region19: #{tpu_custom_call.1} parent=1 // pred_check_branch
      %67 = sbr.rel (0) target = $region21
    $region20: #{tpu_custom_call.1} parent=1 // pred_region
      _
    $region21: #{tpu_custom_call.1} parent=1 // pred_fallthru
      _
    // Predicated region
    $region22: #{tpu_custom_call.1} parent=1 // pred_check
      _
    $region23: #{tpu_custom_call.1} parent=1 // pred_check_branch
      %69 = sbr.rel (0) target = $region25
    $region24: #{tpu_custom_call.1} parent=1 // pred_region
      _
    $region25: #{tpu_custom_call.1} parent=1 // pred_fallthru
      _
    // Predicated region
    $region26: #{tpu_custom_call.1} parent=1 // pred_check
      _
    $region27: #{tpu_custom_call.1} parent=1 // pred_check_branch
      %71 = sbr.rel (0) target = $region29
    $region28: #{tpu_custom_call.1} parent=1 // pred_region
      %72 = dma.done [#allocation5], 256
    $region29: #{tpu_custom_call.1} parent=1 // pred_fallthru
      _
    // Predicated region
    $region30: #{tpu_custom_call.1} parent=1 // pred_check
      _
    $region31: #{tpu_custom_call.1} parent=1 // pred_check_branch
      %74 = sbr.rel (0) target = $region33
    $region32: #{tpu_custom_call.1} parent=1 // pred_region
      %75 = dma.done [#allocation8], 256
    $region33: #{tpu_custom_call.1} parent=1 // pred_fallthru
      _
    // Predicated region
    $region34: #{tpu_custom_call.1} parent=1 // pred_check
      _
    $region35: #{tpu_custom_call.1} parent=1 // pred_check_branch
      %77 = sbr.rel (0) target = $region37
    $region36: #{tpu_custom_call.1} parent=1 // pred_region
      %78 = dma.done [#allocation8], 2048
    $region37: #{tpu_custom_call.1} parent=1 // pred_fallthru
      _
    // Predicated region
    $region38: #{tpu_custom_call.1} parent=1 // pred_check
      _
    $region39: #{tpu_custom_call.1} parent=1 // pred_check_branch
      %80 = sbr.rel (0) target = $region41
    $region40: #{tpu_custom_call.1} parent=1 // pred_region
      %81 = dma.done [#allocation11], 2048
    $region41: #{tpu_custom_call.1} parent=1 // pred_fallthru
      _
    %p82 = scmp.eq.s32.totalorder 0, 0
    // Predicated region
    $region42: #{tpu_custom_call.1} parent=1 // pred_check
      %p83 = pneg %p82
    $region43: #{tpu_custom_call.1} parent=1 // pred_check_branch
      %85 = sbr.rel (%p83) target = $region45
    $region44: #{tpu_custom_call.1} parent=1 // pred_region
      %86 = vst [vmem:[#allocation2] sm:$0xff] 0.0
      %87 = vst [vmem:[#allocation2 + $0x8] sm:$0xff] 0.0
      %88 = vst [vmem:[#allocation3] sm:$0xff] 0.0
      %89 = vst [vmem:[#allocation3 + $0x8] sm:$0xff] 0.0
    $region45: #{tpu_custom_call.1} parent=1 // pred_fallthru
      _
    %v90 = vld [vmem:[#allocation4] sm:$0xff]
    %v91 = vld [vmem:[#allocation4 + $0x8] sm:$0xff]
    %v92 = vld [vmem:[#allocation7] sm:$0xff]
    %v93 = vld [vmem:[#allocation7 + $0x8] sm:$0xff]
    %v94 = vld [vmem:[#allocation9] sm:$0xff]
    %v95 = vld [vmem:[#allocation9 + $0x8] sm:$0xff]
    %v96 = vld [vmem:[#allocation9 + $0x10] sm:$0xff]
    %v97 = vld [vmem:[#allocation9 + $0x18] sm:$0xff]
    %v98 = vld [vmem:[#allocation9 + $0x20] sm:$0xff]
    %v99 = vld [vmem:[#allocation9 + $0x28] sm:$0xff]
    %v100 = vld [vmem:[#allocation9 + $0x30] sm:$0xff]
    %v101 = vld [vmem:[#allocation9 + $0x38] sm:$0xff]
    %v102 = vld [vmem:[#allocation9 + $0x40] sm:$0xff]
    %v103 = vld [vmem:[#allocation9 + $0x48] sm:$0xff]
    %v104 = vld [vmem:[#allocation9 + $0x50] sm:$0xff]
    %v105 = vld [vmem:[#allocation9 + $0x58] sm:$0xff]
    %v106 = vld [vmem:[#allocation9 + $0x60] sm:$0xff]
    %v107 = vld [vmem:[#allocation9 + $0x68] sm:$0xff]
    %v108 = vld [vmem:[#allocation9 + $0x70] sm:$0xff]
    %v109 = vld [vmem:[#allocation9 + $0x78] sm:$0xff]
    %v110 = vld [vmem:[#allocation10] sm:$0xff]
    %v111 = vld [vmem:[#allocation10 + $0x8] sm:$0xff]
    %v112 = vld [vmem:[#allocation10 + $0x10] sm:$0xff]
    %v113 = vld [vmem:[#allocation10 + $0x18] sm:$0xff]
    %v114 = vld [vmem:[#allocation10 + $0x20] sm:$0xff]
    %v115 = vld [vmem:[#allocation10 + $0x28] sm:$0xff]
    %v116 = vld [vmem:[#allocation10 + $0x30] sm:$0xff]
    %v117 = vld [vmem:[#allocation10 + $0x38] sm:$0xff]
    %v118 = vld [vmem:[#allocation10 + $0x40] sm:$0xff]
    %v119 = vld [vmem:[#allocation10 + $0x48] sm:$0xff]
    %v120 = vld [vmem:[#allocation10 + $0x50] sm:$0xff]
    %v121 = vld [vmem:[#allocation10 + $0x58] sm:$0xff]
    %v122 = vld [vmem:[#allocation10 + $0x60] sm:$0xff]
    %v123 = vld [vmem:[#allocation10 + $0x68] sm:$0xff]
    %v124 = vld [vmem:[#allocation10 + $0x70] sm:$0xff]
    %v125 = vld [vmem:[#allocation10 + $0x78] sm:$0xff]
    %v126 = vld [vmem:[#allocation2] sm:$0xff]
    %v127 = vld [vmem:[#allocation2 + $0x8] sm:$0xff]
    %128 = vmatprep.subr.mxu0 0.0
    %129 = vmatpush1.msra.mxu0 %v94
    %130 = vmatprep.subr.mxu0 0.0
    %131 = vmatpush1.msra.mxu0 %v95
    %132 = vmatprep.subr.mxu0 0.0
    %133 = vmatpush1.msra.mxu0 %v96
    %134 = vmatprep.subr.mxu0 0.0
    %135 = vmatpush1.msra.mxu0 %v97
    %136 = vmatprep.subr.mxu0 0.0
    %137 = vmatpush1.msra.mxu0 %v98
    %138 = vmatprep.subr.mxu0 0.0
    %139 = vmatpush1.msra.mxu0 %v99
    %140 = vmatprep.subr.mxu0 0.0
    %141 = vmatpush1.msra.mxu0 %v100
    %142 = vmatprep.subr.mxu0 0.0
    %143 = vmatpush1.msra.mxu0 %v101
    %144 = vmatprep.subr.mxu0 0.0
    %145 = vmatpush1.msra.mxu0 %v102
    %146 = vmatprep.subr.mxu0 0.0
    %147 = vmatpush1.msra.mxu0 %v103
    %148 = vmatprep.subr.mxu0 0.0
    %149 = vmatpush1.msra.mxu0 %v104
    %150 = vmatprep.subr.mxu0 0.0
    %151 = vmatpush1.msra.mxu0 %v105
    %152 = vmatprep.subr.mxu0 0.0
    %153 = vmatpush1.msra.mxu0 %v106
    %154 = vmatprep.subr.mxu0 0.0
    %155 = vmatpush1.msra.mxu0 %v107
    %156 = vmatprep.subr.mxu0 0.0
    %157 = vmatpush1.msra.mxu0 %v108
    %158 = vmatprep.subr.mxu0 0.0
    %159 = vmatpush1.msra.mxu0 %v109
    %160 = vmatprep.subr.mxu0 0.0
    %161 = vmatpush1.msra.mxu0 0.0
    %162 = vmatprep.subr.mxu0 0.0
    %163 = vmatpush1.msra.mxu0 0.0
    %164 = vmatprep.subr.mxu0 0.0
    %165 = vmatpush1.msra.mxu0 0.0
    %166 = vmatprep.subr.mxu0 0.0
    %167 = vmatpush1.msra.mxu0 0.0
    %168 = vmatprep.subr.mxu0 0.0
    %169 = vmatpush1.msra.mxu0 0.0
    %170 = vmatprep.subr.mxu0 0.0
    %171 = vmatpush1.msra.mxu0 0.0
    %172 = vmatprep.subr.mxu0 0.0
    %173 = vmatpush1.msra.mxu0 0.0
    %174 = vmatprep.subr.mxu0 0.0
    %175 = vmatpush1.msra.mxu0 0.0
    %176 = vmatprep.subr.mxu0 0.0
    %177 = vmatpush1.msra.mxu0 0.0
    %178 = vmatprep.subr.mxu0 0.0
    %179 = vmatpush1.msra.mxu0 0.0
    %180 = vmatprep.subr.mxu0 0.0
    %181 = vmatpush1.msra.mxu0 0.0
    %182 = vmatprep.subr.mxu0 0.0
    %183 = vmatpush1.msra.mxu0 0.0
    %184 = vmatprep.subr.mxu0 0.0
    %185 = vmatpush1.msra.mxu0 0.0
    %186 = vmatprep.subr.mxu0 0.0
    %187 = vmatpush1.msra.mxu0 0.0
    %188 = vmatprep.subr.mxu0 0.0
    %189 = vmatpush1.msra.mxu0 0.0
    %190 = vmatprep.subr.mxu0 0.0
    %191 = vmatpush1.msra.mxu0 0.0
    %192 = vmatprep.mubr.f32.mxu0 0.0
    %193 = vmatmul.mubr.f32.gmra.mrb[0].mxu0 %v90
    %v194 = vpop.f32.mrb[0].mxu0
    %v195 = vadd.f32 0.0, %v194
    %v196 = vpop.f32.mrb[0].mxu0
    %197 = vmatprep.mubr.f32.mxu0 0.0
    %198 = vmatmul.mubr.f32.gmra.mrb[0].mxu0 %v91
    %v199 = vpop.f32.mrb[0].mxu0
    %v200 = vadd.f32 0.0, %v199
    %v201 = vpop.f32.mrb[0].mxu0
    %202 = vdwg.mxu0
    %203 = vmatprep.subr.mxu0 0.0
    %204 = vmatpush1.msra.mxu0 %v110
    %205 = vmatprep.subr.mxu0 0.0
    %206 = vmatpush1.msra.mxu0 %v111
    %207 = vmatprep.subr.mxu0 0.0
    %208 = vmatpush1.msra.mxu0 %v112
    %209 = vmatprep.subr.mxu0 0.0
    %210 = vmatpush1.msra.mxu0 %v113
    %211 = vmatprep.subr.mxu0 0.0
    %212 = vmatpush1.msra.mxu0 %v114
    %213 = vmatprep.subr.mxu0 0.0
    %214 = vmatpush1.msra.mxu0 %v115
    %215 = vmatprep.subr.mxu0 0.0
    %216 = vmatpush1.msra.mxu0 %v116
    %217 = vmatprep.subr.mxu0 0.0
    %218 = vmatpush1.msra.mxu0 %v117
    %219 = vmatprep.subr.mxu0 0.0
    %220 = vmatpush1.msra.mxu0 %v118
    %221 = vmatprep.subr.mxu0 0.0
    %222 = vmatpush1.msra.mxu0 %v119
    %223 = vmatprep.subr.mxu0 0.0
    %224 = vmatpush1.msra.mxu0 %v120
    %225 = vmatprep.subr.mxu0 0.0
    %226 = vmatpush1.msra.mxu0 %v121
    %227 = vmatprep.subr.mxu0 0.0
    %228 = vmatpush1.msra.mxu0 %v122
    %229 = vmatprep.subr.mxu0 0.0
    %230 = vmatpush1.msra.mxu0 %v123
    %231 = vmatprep.subr.mxu0 0.0
    %232 = vmatpush1.msra.mxu0 %v124
    %233 = vmatprep.subr.mxu0 0.0
    %234 = vmatpush1.msra.mxu0 %v125
    %235 = vmatprep.subr.mxu0 0.0
    %236 = vmatpush1.msra.mxu0 0.0
    %237 = vmatprep.subr.mxu0 0.0
    %238 = vmatpush1.msra.mxu0 0.0
    %239 = vmatprep.subr.mxu0 0.0
    %240 = vmatpush1.msra.mxu0 0.0
    %241 = vmatprep.subr.mxu0 0.0
    %242 = vmatpush1.msra.mxu0 0.0
    %243 = vmatprep.subr.mxu0 0.0
    %244 = vmatpush1.msra.mxu0 0.0
    %245 = vmatprep.subr.mxu0 0.0
    %246 = vmatpush1.msra.mxu0 0.0
    %247 = vmatprep.subr.mxu0 0.0
    %248 = vmatpush1.msra.mxu0 0.0
    %249 = vmatprep.subr.mxu0 0.0
    %250 = vmatpush1.msra.mxu0 0.0
    %251 = vmatprep.subr.mxu0 0.0
    %252 = vmatpush1.msra.mxu0 0.0
    %253 = vmatprep.subr.mxu0 0.0
    %254 = vmatpush1.msra.mxu0 0.0
    %255 = vmatprep.subr.mxu0 0.0
    %256 = vmatpush1.msra.mxu0 0.0
    %257 = vmatprep.subr.mxu0 0.0
    %258 = vmatpush1.msra.mxu0 0.0
    %259 = vmatprep.subr.mxu0 0.0
    %260 = vmatpush1.msra.mxu0 0.0
    %261 = vmatprep.subr.mxu0 0.0
    %262 = vmatpush1.msra.mxu0 0.0
    %263 = vmatprep.subr.mxu0 0.0
    %264 = vmatpush1.msra.mxu0 0.0
    %265 = vmatprep.subr.mxu0 0.0
    %266 = vmatpush1.msra.mxu0 0.0
    %267 = vmatprep.mubr.f32.mxu0 0.0
    %268 = vmatmul.mubr.f32.gmra.mrb[0].mxu0 %v92
    %v269 = vpop.f32.mrb[0].mxu0
    %v270 = vadd.f32 0.0, %v269
    %v271 = vpop.f32.mrb[0].mxu0
    %272 = vmatprep.mubr.f32.mxu0 0.0
    %273 = vmatmul.mubr.f32.gmra.mrb[0].mxu0 %v93
    %v274 = vpop.f32.mrb[0].mxu0
    %v275 = vadd.f32 0.0, %v274
    %v276 = vpop.f32.mrb[0].mxu0
    %277 = vdwg.mxu0
    %v278 = vsub.f32 %v195, %v270
    %v279 = vsub.f32 %v200, %v275
    %v280 = vadd.f32 %v126, %v278
    %v281 = vadd.f32 %v127, %v279
    %282 = vst [vmem:[#allocation2] sm:$0xff] %v280
    %283 = vst [vmem:[#allocation2 + $0x8] sm:$0xff] %v281
    %v284 = vld [vmem:[#allocation3] sm:$0xff]
    %v285 = vld [vmem:[#allocation3 + $0x8] sm:$0xff]
    %286 = vmatprep.subr.mxu0 0.0
    %287 = vmatpush1.msra.mxu0 %v94
    %288 = vmatprep.subr.mxu0 0.0
    %289 = vmatpush1.msra.mxu0 %v95
    %290 = vmatprep.subr.mxu0 0.0
    %291 = vmatpush1.msra.mxu0 %v96
    %292 = vmatprep.subr.mxu0 0.0
    %293 = vmatpush1.msra.mxu0 %v97
    %294 = vmatprep.subr.mxu0 0.0
    %295 = vmatpush1.msra.mxu0 %v98
    %296 = vmatprep.subr.mxu0 0.0
    %297 = vmatpush1.msra.mxu0 %v99
    %298 = vmatprep.subr.mxu0 0.0
    %299 = vmatpush1.msra.mxu0 %v100
    %300 = vmatprep.subr.mxu0 0.0
    %301 = vmatpush1.msra.mxu0 %v101
    %302 = vmatprep.subr.mxu0 0.0
    %303 = vmatpush1.msra.mxu0 %v102
    %304 = vmatprep.subr.mxu0 0.0
    %305 = vmatpush1.msra.mxu0 %v103
    %306 = vmatprep.subr.mxu0 0.0
    %307 = vmatpush1.msra.mxu0 %v104
    %308 = vmatprep.subr.mxu0 0.0
    %309 = vmatpush1.msra.mxu0 %v105
    %310 = vmatprep.subr.mxu0 0.0
    %311 = vmatpush1.msra.mxu0 %v106
    %312 = vmatprep.subr.mxu0 0.0
    %313 = vmatpush1.msra.mxu0 %v107
    %314 = vmatprep.subr.mxu0 0.0
    %315 = vmatpush1.msra.mxu0 %v108
    %316 = vmatprep.subr.mxu0 0.0
    %317 = vmatpush1.msra.mxu0 %v109
    %318 = vmatprep.subr.mxu0 0.0
    %319 = vmatpush1.msra.mxu0 0.0
    %320 = vmatprep.subr.mxu0 0.0
    %321 = vmatpush1.msra.mxu0 0.0
    %322 = vmatprep.subr.mxu0 0.0
    %323 = vmatpush1.msra.mxu0 0.0
    %324 = vmatprep.subr.mxu0 0.0
    %325 = vmatpush1.msra.mxu0 0.0
    %326 = vmatprep.subr.mxu0 0.0
    %327 = vmatpush1.msra.mxu0 0.0
    %328 = vmatprep.subr.mxu0 0.0
    %329 = vmatpush1.msra.mxu0 0.0
    %330 = vmatprep.subr.mxu0 0.0
    %331 = vmatpush1.msra.mxu0 0.0
    %332 = vmatprep.subr.mxu0 0.0
    %333 = vmatpush1.msra.mxu0 0.0
    %334 = vmatprep.subr.mxu0 0.0
    %335 = vmatpush1.msra.mxu0 0.0
    %336 = vmatprep.subr.mxu0 0.0
    %337 = vmatpush1.msra.mxu0 0.0
    %338 = vmatprep.subr.mxu0 0.0
    %339 = vmatpush1.msra.mxu0 0.0
    %340 = vmatprep.subr.mxu0 0.0
    %341 = vmatpush1.msra.mxu0 0.0
    %342 = vmatprep.subr.mxu0 0.0
    %343 = vmatpush1.msra.mxu0 0.0
    %344 = vmatprep.subr.mxu0 0.0
    %345 = vmatpush1.msra.mxu0 0.0
    %346 = vmatprep.subr.mxu0 0.0
    %347 = vmatpush1.msra.mxu0 0.0
    %348 = vmatprep.subr.mxu0 0.0
    %349 = vmatpush1.msra.mxu0 0.0
    %350 = vmatprep.mubr.f32.mxu0 0.0
    %351 = vmatmul.mubr.f32.gmra.mrb[0].mxu0 %v92
    %v352 = vpop.f32.mrb[0].mxu0
    %v353 = vadd.f32 0.0, %v352
    %v354 = vpop.f32.mrb[0].mxu0
    %355 = vmatprep.mubr.f32.mxu0 0.0
    %356 = vmatmul.mubr.f32.gmra.mrb[0].mxu0 %v93
    %v357 = vpop.f32.mrb[0].mxu0
    %v358 = vadd.f32 0.0, %v357
    %v359 = vpop.f32.mrb[0].mxu0
    %360 = vdwg.mxu0
    %361 = vmatprep.subr.mxu0 0.0
    %362 = vmatpush1.msra.mxu0 %v110
    %363 = vmatprep.subr.mxu0 0.0
    %364 = vmatpush1.msra.mxu0 %v111
    %365 = vmatprep.subr.mxu0 0.0
    %366 = vmatpush1.msra.mxu0 %v112
    %367 = vmatprep.subr.mxu0 0.0
    %368 = vmatpush1.msra.mxu0 %v113
    %369 = vmatprep.subr.mxu0 0.0
    %370 = vmatpush1.msra.mxu0 %v114
    %371 = vmatprep.subr.mxu0 0.0
    %372 = vmatpush1.msra.mxu0 %v115
    %373 = vmatprep.subr.mxu0 0.0
    %374 = vmatpush1.msra.mxu0 %v116
    %375 = vmatprep.subr.mxu0 0.0
    %376 = vmatpush1.msra.mxu0 %v117
    %377 = vmatprep.subr.mxu0 0.0
    %378 = vmatpush1.msra.mxu0 %v118
    %379 = vmatprep.subr.mxu0 0.0
    %380 = vmatpush1.msra.mxu0 %v119
    %381 = vmatprep.subr.mxu0 0.0
    %382 = vmatpush1.msra.mxu0 %v120
    %383 = vmatprep.subr.mxu0 0.0
    %384 = vmatpush1.msra.mxu0 %v121
    %385 = vmatprep.subr.mxu0 0.0
    %386 = vmatpush1.msra.mxu0 %v122
    %387 = vmatprep.subr.mxu0 0.0
    %388 = vmatpush1.msra.mxu0 %v123
    %389 = vmatprep.subr.mxu0 0.0
    %390 = vmatpush1.msra.mxu0 %v124
    %391 = vmatprep.subr.mxu0 0.0
    %392 = vmatpush1.msra.mxu0 %v125
    %393 = vmatprep.subr.mxu0 0.0
    %394 = vmatpush1.msra.mxu0 0.0
    %395 = vmatprep.subr.mxu0 0.0
    %396 = vmatpush1.msra.mxu0 0.0
    %397 = vmatprep.subr.mxu0 0.0
    %398 = vmatpush1.msra.mxu0 0.0
    %399 = vmatprep.subr.mxu0 0.0
    %400 = vmatpush1.msra.mxu0 0.0
    %401 = vmatprep.subr.mxu0 0.0
    %402 = vmatpush1.msra.mxu0 0.0
    %403 = vmatprep.subr.mxu0 0.0
    %404 = vmatpush1.msra.mxu0 0.0
    %405 = vmatprep.subr.mxu0 0.0
    %406 = vmatpush1.msra.mxu0 0.0
    %407 = vmatprep.subr.mxu0 0.0
    %408 = vmatpush1.msra.mxu0 0.0
    %409 = vmatprep.subr.mxu0 0.0
    %410 = vmatpush1.msra.mxu0 0.0
    %411 = vmatprep.subr.mxu0 0.0
    %412 = vmatpush1.msra.mxu0 0.0
    %413 = vmatprep.subr.mxu0 0.0
    %414 = vmatpush1.msra.mxu0 0.0
    %415 = vmatprep.subr.mxu0 0.0
    %416 = vmatpush1.msra.mxu0 0.0
    %417 = vmatprep.subr.mxu0 0.0
    %418 = vmatpush1.msra.mxu0 0.0
    %419 = vmatprep.subr.mxu0 0.0
    %420 = vmatpush1.msra.mxu0 0.0
    %421 = vmatprep.subr.mxu0 0.0
    %422 = vmatpush1.msra.mxu0 0.0
    %423 = vmatprep.subr.mxu0 0.0
    %424 = vmatpush1.msra.mxu0 0.0
    %425 = vmatprep.mubr.f32.mxu0 0.0
    %426 = vmatmul.mubr.f32.gmra.mrb[0].mxu0 %v90
    %v427 = vpop.f32.mrb[0].mxu0
    %v428 = vadd.f32 %v353, %v427
    %v429 = vpop.f32.mrb[0].mxu0
    %430 = vmatprep.mubr.f32.mxu0 0.0
    %431 = vmatmul.mubr.f32.gmra.mrb[0].mxu0 %v91
    %v432 = vpop.f32.mrb[0].mxu0
    %v433 = vadd.f32 %v358, %v432
    %v434 = vpop.f32.mrb[0].mxu0
    %435 = vdwg.mxu0
    %v436 = vadd.f32 %v284, %v428
    %v437 = vadd.f32 %v285, %v433
    %438 = vst [vmem:[#allocation3] sm:$0xff] %v436
    %439 = vst [vmem:[#allocation3 + $0x8] sm:$0xff] %v437
    // Predicated region
    $region46: #{tpu_custom_call.1} parent=1 // pred_check
      %p440 = pneg %p82
    $region47: #{tpu_custom_call.1} parent=1 // pred_check_branch
      %442 = sbr.rel (%p440) target = $region49
    $region48: #{tpu_custom_call.1} parent=1 // pred_region
      %v443 = vld [vmem:[#allocation2] sm:$0xff]
      %v444 = vld [vmem:[#allocation2 + $0x8] sm:$0xff]
      %v445 = vld [vmem:[%s4] sm:$0x1]
      %v447 = vlaneseq
      %v448 = vshrl.u32 %v447, 7
      %v449 = vsub.s32 0, %v448
      %v450 = vrot.slane %v445, %v449
      %v452 = vadd.f32 %v443, %v450
      %v453 = vadd.f32 %v444, %v450
      %454 = vst [vmem:[#allocation12] sm:$0xff] %v452
      %455 = vst [vmem:[#allocation12 + $0x8] sm:$0xff] %v453
      %v456 = vld [vmem:[#allocation3] sm:$0xff]
      %v457 = vld [vmem:[#allocation3 + $0x8] sm:$0xff]
      %v458 = vld [vmem:[%s5] sm:$0x1]
      %v460 = vlaneseq
      %v461 = vshrl.u32 %v460, 7
      %v462 = vsub.s32 0, %v461
      %v463 = vrot.slane %v458, %v462
      %v465 = vadd.f32 %v456, %v463
      %v466 = vadd.f32 %v457, %v463
      %467 = vst [vmem:[#allocation13] sm:$0xff] %v465
      %468 = vst [vmem:[#allocation13 + $0x8] sm:$0xff] %v466
    $region49: #{tpu_custom_call.1} parent=1 // pred_fallthru
      _
    // Predicated region
    $region50: #{tpu_custom_call.1} parent=1 // pred_check
      _
    $region51: #{tpu_custom_call.1} parent=1 // pred_check_branch
      %470 = sbr.rel (0) target = $region53
    $region52: #{tpu_custom_call.1} parent=1 // pred_region
      %s472 = ssub.s32 256, 256
      %473 = vsyncadd [#allocation6], %s472
      %s474 = sshll.u32 [#allocation12], 4
      %s475 = int_to_ptr.vmem [resolvable:$true] %s474
      %480 = dma.vmem_to_hbm [thread:$0]  %s475, 256, %s6, [#allocation6], 128, 128, 8
    $region53: #{tpu_custom_call.1} parent=1 // pred_fallthru
      _
    // Predicated region
    $region54: #{tpu_custom_call.1} parent=1 // pred_check
      _
    $region55: #{tpu_custom_call.1} parent=1 // pred_check_branch
      %482 = sbr.rel (0) target = $region57
    $region56: #{tpu_custom_call.1} parent=1 // pred_region
      %s484 = ssub.s32 256, 256
      %485 = vsyncadd [#allocation14], %s484
      %s486 = sshll.u32 [#allocation13], 4
      %s487 = int_to_ptr.vmem [resolvable:$true] %s486
      %492 = dma.vmem_to_hbm [thread:$0]  %s487, 256, %s7, [#allocation14], 128, 128, 8
    $region57: #{tpu_custom_call.1} parent=1 // pred_fallthru
      _
    // Predicated region
    $region58: #{tpu_custom_call.1} parent=1 // pred_check
      _
    $region59: #{tpu_custom_call.1} parent=1 // pred_check_branch
      %494 = sbr.rel (0) target = $region61
    $region60: #{tpu_custom_call.1} parent=1 // pred_region
      %495 = dma.done [#allocation6], 256
    $region61: #{tpu_custom_call.1} parent=1 // pred_fallthru
      _
    // Predicated region
    $region62: #{tpu_custom_call.1} parent=1 // pred_check
      _
    $region63: #{tpu_custom_call.1} parent=1 // pred_check_branch
      %497 = sbr.rel (0) target = $region65
    $region64: #{tpu_custom_call.1} parent=1 // pred_region
      %498 = dma.done [#allocation14], 256
    $region65: #{tpu_custom_call.1} parent=1 // pred_fallthru
      _
    %499 = vsyncpa [#allocation5], 1
    %500 = vsyncpa [#allocation8], 1
    %501 = vsyncpa [#allocation11], 1
    %502 = vsyncpa [#allocation6], 1
    %503 = vsyncpa [#allocation14], 1

</llo_original>
